<compile_context>
chip_gen: v6e
topology: v6e:2x2x1
jax: 0.10.0
libtpu: 0.0.40
codegen_flags: <defaults>
</compile_context>

<pallas_src>
import functools
import math

import jax
import jax.numpy as jnp
from jax.experimental import pallas as pl
from jax.experimental.pallas import tpu as pltpu

_VMEM_LIMIT = 64 * 1024 * 1024  # <= physical VMEM on v5e/v6e/v7x


# ----------------------------------------------------------------------------
# Stage 1a: GroupNorm statistics.  grid = (B, token_tiles).  Per-channel sum /
# sum-of-squares accumulate in VMEM scratch; group mean / rstd are written on
# the last token tile via the group-projection matrix P[c,c'] = [same group].
# ----------------------------------------------------------------------------
def _gn_stats_kernel(x_ref, gproj_ref, mean_ref, rstd_ref, sum_sc, sq_sc, *,
                     count, eps):
    ti = pl.program_id(1)

    @pl.when(ti == 0)
    def _():
        sum_sc[...] = jnp.zeros_like(sum_sc)
        sq_sc[...] = jnp.zeros_like(sq_sc)

    x = x_ref[0].astype(jnp.float32)                       # (t, C)
    sum_sc[...] += jnp.sum(x, axis=0, keepdims=True)       # (1, C)
    sq_sc[...] += jnp.sum(x * x, axis=0, keepdims=True)    # (1, C)

    @pl.when(ti == pl.num_programs(1) - 1)
    def _():
        mean_c = jnp.dot(sum_sc[...], gproj_ref[...],
                         preferred_element_type=jnp.float32) / count
        ex2_c = jnp.dot(sq_sc[...], gproj_ref[...],
                        preferred_element_type=jnp.float32) / count
        mean_ref[0] = mean_c
        rstd_ref[0] = jax.lax.rsqrt(ex2_c - mean_c * mean_c + eps)


# ----------------------------------------------------------------------------
# Stage 1b: normalize + q/k/v NiN projections.  grid = (B, token_tiles).
# Token-major branch produces q (pre-scaled by C^-1/2) and v; a channel-major
# branch (fed directly by the NCHW layout of x) produces K already transposed
# as (C, tk) blocks -- no in-kernel transpose needed anywhere.
# ----------------------------------------------------------------------------
def _gn_qkv_kernel(xt_ref, xc_ref, mean_ref, rstd_ref, meant_ref, rstdt_ref,
                   gamma_ref, beta_ref, gammat_ref, betat_ref,
                   wq_ref, bq_ref, wkt_ref, bkt_ref, wv_ref, bv_ref,
                   q_ref, kt_ref, v_ref, *, scale):
    # Token-major branch -> q, v.
    xt = xt_ref[0].astype(jnp.float32)                     # (t, C)
    h = (xt - mean_ref[0]) * rstd_ref[0] * gamma_ref[...] + beta_ref[...]
    h = h.astype(wq_ref.dtype)
    q = jnp.dot(h, wq_ref[...], preferred_element_type=jnp.float32) + bq_ref[...]
    q_ref[0] = (q * scale).astype(q_ref.dtype)             # fold C^-1/2 into q
    v = jnp.dot(h, wv_ref[...], preferred_element_type=jnp.float32) + bv_ref[...]
    v_ref[0, 0] = v.astype(v_ref.dtype)
    # Channel-major branch -> k, produced directly in (C, t) layout so the
    # attention score matmul needs no RHS transpose (keys live on lanes).
    xc = xc_ref[0].astype(jnp.float32)                     # (C, t)
    ht = (xc - meant_ref[0]) * rstdt_ref[0] * gammat_ref[...] + betat_ref[...]
    ht = ht.astype(wkt_ref.dtype)
    kt = jnp.dot(wkt_ref[...], ht, preferred_element_type=jnp.float32) + bkt_ref[...]
    kt_ref[0, 0] = kt.astype(kt_ref.dtype)


# ----------------------------------------------------------------------------
# Stage 2: flash attention over the H*W tokens + NiN_3 + residual + rescale.
# grid = (B, q_tiles); K/V are VMEM-resident per image (block index depends
# only on b) and the key loop is an in-kernel fori_loop over resident tiles.
# ----------------------------------------------------------------------------
def _attn_kernel(q_ref, kt_ref, v_ref, x_ref, w3_ref, b3_ref, o_ref,
                 m_sc, l_sc, acc_sc, *, n_real, tk, nk, out_scale, mask_keys,
                 approx_recip):
    m_sc[...] = jnp.full_like(m_sc, -jnp.inf)
    l_sc[...] = jnp.zeros_like(l_sc)
    acc_sc[...] = jnp.zeros_like(acc_sc)
    q = q_ref[0]                                           # (tq, C)

    def body(ki, carry):
        kt = kt_ref[0, ki]                                 # (C, tk)  resident VMEM
        vt = v_ref[0, ki]                                  # (tk, C)  resident VMEM
        s = jnp.dot(q, kt, preferred_element_type=jnp.float32)      # (tq, tk)
        if mask_keys:
            col = jax.lax.broadcasted_iota(jnp.int32, s.shape, 1) + ki * tk
            s = jnp.where(col < n_real, s, -jnp.inf)
        m_prev = m_sc[...]
        m_new = jnp.maximum(m_prev, jnp.max(s, axis=-1, keepdims=True))
        alpha = jnp.exp(m_prev - m_new)
        p = jnp.exp(s - m_new)
        l_sc[...] = alpha * l_sc[...] + jnp.sum(p, axis=-1, keepdims=True)
        acc_sc[...] = alpha * acc_sc[...] + jnp.dot(
            p.astype(vt.dtype), vt, preferred_element_type=jnp.float32)
        m_sc[...] = m_new
        return carry

    jax.lax.fori_loop(0, nk, body, 0)

    inv_l = (pl.reciprocal(l_sc[...], approx=True) if approx_recip
             else 1.0 / l_sc[...])
    ctx = (acc_sc[...] * inv_l).astype(w3_ref.dtype)       # (tq, C)
    h = jnp.dot(ctx, w3_ref[...], preferred_element_type=jnp.float32) + b3_ref[...]
    o_ref[0] = ((x_ref[0].astype(jnp.float32) + h) * out_scale).astype(o_ref.dtype)


# ----------------------------------------------------------------------------
# Wrapper
# ----------------------------------------------------------------------------
def _divisor_tile(n128, max_mult):
    d = max_mult
    while n128 % d:
        d -= 1
    return d * 128


def attn_block(x, gamma, beta, wq, bq, wk, bk, wv, bv, w3, b3, *,
               skip_rescale=True, eps=1e-6, compute_dtype=jnp.bfloat16):
    """x: (B, C, H, W).  NiN weights: (C, C) matrices + (C,) biases."""
    B, C, H, W = x.shape
    N = H * W
    out_dtype = x.dtype
    G = min(C // 4, 32)                        # matches torch: min(channels//4, 32)
    assert G >= 1 and C % G == 0, (C, G)
    Cg = C // G
    cdt = jnp.dtype(compute_dtype)
    exact = (cdt == jnp.dtype(jnp.float32))

    # --- layout glue: one NCHW->token transpose; the channel-major view of x
    #     used for the pre-transposed K is the native layout (free reshape). ---
    Np = pl.cdiv(N, 128) * 128
    pad = Np - N
    x_tok = jnp.transpose(x, (0, 2, 3, 1)).reshape(B, N, C)        # (B, N, C)
    x_chn = x.reshape(B, C, N)                                     # (B, C, N)
    if pad:
        x_tok = jnp.pad(x_tok, ((0, 0), (0, pad), (0, 0)))
        x_chn = jnp.pad(x_chn, ((0, 0), (0, 0), (0, pad)))
    x_tok = x_tok.astype(cdt)
    x_chn = x_chn.astype(cdt)

    # --- parameter prep (tiny, done once) ---
    gid = jnp.arange(C) // Cg
    gproj = (gid[:, None] == gid[None, :]).astype(jnp.float32)     # (C, C)
    gamma_r = gamma.reshape(1, C).astype(jnp.float32)
    beta_r = beta.reshape(1, C).astype(jnp.float32)
    gamma_t = gamma.reshape(C, 1).astype(jnp.float32)
    beta_t = beta.reshape(C, 1).astype(jnp.float32)
    wq_c, wv_c, w3_c = (w.astype(cdt) for w in (wq, wv, w3))
    wkt_c = jnp.transpose(wk).astype(cdt)                          # (C, C)
    bq_r = bq.reshape(1, C).astype(jnp.float32)
    bv_r = bv.reshape(1, C).astype(jnp.float32)
    b3_r = b3.reshape(1, C).astype(jnp.float32)
    bkt_r = bk.reshape(C, 1).astype(jnp.float32)

    # --- tile sizes ---
    n128 = Np // 128
    tk = _divisor_tile(n128, 4)        # key / stage-1 token tile (<= 512 lanes)
    nk = Np // tk
    tq = 128                           # query tile (v5e MXU friendly; acc = tq*C f32)
    nq = Np // tq
    scale = float(C) ** -0.5
    out_scale = (1.0 / math.sqrt(2.0)) if skip_rescale else 1.0

    # ---------------- stage 1a: GroupNorm statistics -------------------------
    mean, rstd = pl.pallas_call(
        functools.partial(_gn_stats_kernel, count=float(N * Cg), eps=eps),
        out_shape=(jax.ShapeDtypeStruct((B, 1, C), jnp.float32),
                   jax.ShapeDtypeStruct((B, 1, C), jnp.float32)),
        grid=(B, nk),
        in_specs=[pl.BlockSpec((1, tk, C), lambda b, t: (b, t, 0)),
                  pl.BlockSpec((C, C), lambda b, t: (0, 0))],
        out_specs=(pl.BlockSpec((1, 1, C), lambda b, t: (b, 0, 0)),
                   pl.BlockSpec((1, 1, C), lambda b, t: (b, 0, 0))),
        scratch_shapes=[pltpu.VMEM((1, C), jnp.float32),
                        pltpu.VMEM((1, C), jnp.float32)],
        compiler_params=pltpu.CompilerParams(
            dimension_semantics=("parallel", "arbitrary"),
            vmem_limit_bytes=_VMEM_LIMIT),
    )(x_tok, gproj)
    mean_t = jnp.swapaxes(mean, 1, 2)                              # (B, C, 1)
    rstd_t = jnp.swapaxes(rstd, 1, 2)

    # ---------------- stage 1b: normalize + q / kT / v NiN -------------------
    q, k_t, v = pl.pallas_call(
        functools.partial(_gn_qkv_kernel, scale=scale),
        out_shape=(jax.ShapeDtypeStruct((B, Np, C), cdt),          # q (pre-scaled)
                   jax.ShapeDtypeStruct((B, nk, C, tk), cdt),      # K pre-transposed
                   jax.ShapeDtypeStruct((B, nk, tk, C), cdt)),     # V
        grid=(B, nk),
        in_specs=[pl.BlockSpec((1, tk, C), lambda b, t: (b, t, 0)),
                  pl.BlockSpec((1, C, tk), lambda b, t: (b, 0, t)),
                  pl.BlockSpec((1, 1, C), lambda b, t: (b, 0, 0)),
                  pl.BlockSpec((1, 1, C), lambda b, t: (b, 0, 0)),
                  pl.BlockSpec((1, C, 1), lambda b, t: (b, 0, 0)),
                  pl.BlockSpec((1, C, 1), lambda b, t: (b, 0, 0)),
                  pl.BlockSpec((1, C), lambda b, t: (0, 0)),
                  pl.BlockSpec((1, C), lambda b, t: (0, 0)),
                  pl.BlockSpec((C, 1), lambda b, t: (0, 0)),
                  pl.BlockSpec((C, 1), lambda b, t: (0, 0)),
                  pl.BlockSpec((C, C), lambda b, t: (0, 0)),
                  pl.BlockSpec((1, C), lambda b, t: (0, 0)),
                  pl.BlockSpec((C, C), lambda b, t: (0, 0)),
                  pl.BlockSpec((C, 1), lambda b, t: (0, 0)),
                  pl.BlockSpec((C, C), lambda b, t: (0, 0)),
                  pl.BlockSpec((1, C), lambda b, t: (0, 0))],
        out_specs=(pl.BlockSpec((1, tk, C), lambda b, t: (b, t, 0)),
                   pl.BlockSpec((1, 1, C, tk), lambda b, t: (b, t, 0, 0)),
                   pl.BlockSpec((1, 1, tk, C), lambda b, t: (b, t, 0, 0))),
        compiler_params=pltpu.CompilerParams(
            dimension_semantics=("parallel", "parallel"),
            vmem_limit_bytes=_VMEM_LIMIT),
    )(x_tok, x_chn, mean, rstd, mean_t, rstd_t, gamma_r, beta_r, gamma_t,
      beta_t, wq_c, bq_r, wkt_c, bkt_r, wv_c, bv_r)

    # ---------------- stage 2: flash attention + NiN_3 + residual ------------
    y = pl.pallas_call(
        functools.partial(_attn_kernel, n_real=N, tk=tk, nk=nk,
                          out_scale=out_scale, mask_keys=(pad != 0),
                          approx_recip=not exact),
        out_shape=jax.ShapeDtypeStruct((B, Np, C), out_dtype),
        grid=(B, nq),
        in_specs=[pl.BlockSpec((1, tq, C), lambda b, qi: (b, qi, 0)),
                  pl.BlockSpec((1, nk, C, tk), lambda b, qi: (b, 0, 0, 0)),
                  pl.BlockSpec((1, nk, tk, C), lambda b, qi: (b, 0, 0, 0)),
                  pl.BlockSpec((1, tq, C), lambda b, qi: (b, qi, 0)),
                  pl.BlockSpec((C, C), lambda b, qi: (0, 0)),
                  pl.BlockSpec((1, C), lambda b, qi: (0, 0))],
        out_specs=pl.BlockSpec((1, tq, C), lambda b, qi: (b, qi, 0)),
        scratch_shapes=[pltpu.VMEM((tq, 1), jnp.float32),   # running max
                        pltpu.VMEM((tq, 1), jnp.float32),   # running denom
                        pltpu.VMEM((tq, C), jnp.float32)],  # running numerator
        compiler_params=pltpu.CompilerParams(
            dimension_semantics=("parallel", "parallel"),
            vmem_limit_bytes=_VMEM_LIMIT),
    )(q, k_t, v, x_tok, w3_c, b3_r)

    y = y[:, :N, :]
    return jnp.transpose(y.reshape(B, H, W, C), (0, 3, 1, 2))


# ----------------------------------------------------------------------------
# Pure-JAX reference (mirrors the PyTorch AttnBlock forward exactly)
# ----------------------------------------------------------------------------
def _reference(x, gamma, beta, wq, bq, wk, bk, wv, bv, w3, b3,
               *, skip_rescale=True, eps=1e-6):
    B, C, H, W = x.shape
    G = min(C // 4, 32)
    xg = x.reshape(B, G, C // G, H, W)
    mean = xg.mean(axis=(2, 3, 4), keepdims=True)
    var = jnp.mean((xg - mean) ** 2, axis=(2, 3, 4), keepdims=True)
    h = ((xg - mean) / jnp.sqrt(var + eps)).reshape(B, C, H, W)
    h = h * gamma[None, :, None, None] + beta[None, :, None, None]

    def nin(t, wm, bm):
        return jnp.einsum('bchw,ck->bkhw', t, wm) + bm[None, :, None, None]

    q = nin(h, wq, bq)
    k = nin(h, wk, bk)
    v = nin(h, wv, bv)
    w = jnp.einsum('bchw,bcij->bhwij', q, k) * (float(C) ** -0.5)
    w = w.reshape(B, H, W, H * W)
    w = jax.nn.softmax(w, axis=-1)
    w = w.reshape(B, H, W, H, W)
    h = jnp.einsum('bhwij,bcij->bchw', w, v)
    h = nin(h, w3, b3)
    out = x + h
    if skip_rescale:
        out = out / jnp.sqrt(2.0)
    return out


if __name__ == "__main__":
    key = jax.random.PRNGKey(0)
    ks = jax.random.split(key, 11)

    B, C, H, W = 2, 4, 16, 16
    x = jax.random.normal(ks[0], (B, C, H, W), jnp.float32)
    gamma = 1.0 + 0.1 * jax.random.normal(ks[1], (C,), jnp.float32)
    beta = 0.1 * jax.random.normal(ks[2], (C,), jnp.float32)
    wq = 0.3 * jax.random.normal(ks[3], (C, C), jnp.float32)
    bq = 0.1 * jax.random.normal(ks[4], (C,), jnp.float32)
    wk = 0.3 * jax.random.normal(ks[5], (C, C), jnp.float32)
    bk = 0.1 * jax.random.normal(ks[6], (C,), jnp.float32)
    wv = 0.3 * jax.random.normal(ks[7], (C, C), jnp.float32)
    bv = 0.1 * jax.random.normal(ks[8], (C,), jnp.float32)
    w3 = 0.3 * jax.random.normal(ks[9], (C, C), jnp.float32)
    b3 = 0.1 * jax.random.normal(ks[10], (C,), jnp.float32)

    args = (x, gamma, beta, wq, bq, wk, bk, wv, bv, w3, b3)
    ref = jax.block_until_ready(_reference(*args))

    # Fast path: bf16 MXU matmuls, f32 accumulation / online-softmax state.
    out_bf16 = jax.block_until_ready(attn_block(*args, compute_dtype=jnp.bfloat16))
    assert out_bf16.shape == (B, C, H, W), out_bf16.shape
    err_bf16 = float(jnp.max(jnp.abs(out_bf16 - ref)))
    assert err_bf16 < 5e-2, err_bf16

    # Exact path: pure f32, matches the reference tightly.
    out_f32 = jax.block_until_ready(attn_block(*args, compute_dtype=jnp.float32))
    err_f32 = float(jnp.max(jnp.abs(out_f32 - ref)))
    assert err_f32 < 1e-4, err_f32

    print("KERNEL_OK")
</pallas_src>

<mosaic_0001>
module attributes {stable_mosaic.version = 11 : i64} {
  func.func @_gn_stats_kernel(%arg0: i32, %arg1: i32, %arg2: memref<1x256x4xbf16, #tpu.memory_space<vmem>>, %arg3: memref<4x4xf32, #tpu.memory_space<vmem>>, %arg4: memref<1x1x4xf32, #tpu.memory_space<vmem>>, %arg5: memref<1x1x4xf32, #tpu.memory_space<vmem>>, %arg6: memref<1x4xf32, #tpu.memory_space<vmem>>, %arg7: memref<1x4xf32, #tpu.memory_space<vmem>>) attributes {dimension_semantics = [#tpu.dimension_semantics<parallel>, #tpu.dimension_semantics<arbitrary>], iteration_bounds = array<i64: 2, 1>, scalar_prefetch = 0 : i64, scratch_operands = 2 : i64, tpu.core_type = #tpu.core_type<tc>, window_params = [{transform_indices = @transform_0, window_bounds = array<i64: 1, 256, 4>}, {pipeline_mode = #tpu.pipeline_mode<synchronous>, transform_indices = @transform_1, window_bounds = array<i64: 4, 4>}, {transform_indices = @transform_2, window_bounds = array<i64: 1, 1, 4>}, {transform_indices = @transform_3, window_bounds = array<i64: 1, 1, 4>}]} {
    %c0_i32 = arith.constant 0 : i32
    %0 = arith.cmpi eq, %arg1, %c0_i32 : i32
    %1 = arith.extui %0 : i1 to i32
    %c0_i32_0 = arith.constant 0 : i32
    %2 = arith.cmpi ne, %1, %c0_i32_0 : i32
    scf.if %2 {
      %cst_14 = arith.constant 0.000000e+00 : f32
      %20 = vector.broadcast %cst_14 : f32 to vector<1x4xf32>
      %c0_15 = arith.constant 0 : index
      %c0_16 = arith.constant 0 : index
      %21 = vector.load %arg6[%c0_15, %c0_16] : memref<1x4xf32, #tpu.memory_space<vmem>>, vector<1x4xf32>
      tpu.vector_store %arg6[%c0_15, %c0_16], %20 {strides = array<i32>} : memref<1x4xf32, #tpu.memory_space<vmem>>, vector<1x4xf32>,
      %cst_17 = arith.constant 0.000000e+00 : f32
      %22 = vector.broadcast %cst_17 : f32 to vector<1x4xf32>
      %c0_18 = arith.constant 0 : index
      %c0_19 = arith.constant 0 : index
      %23 = vector.load %arg7[%c0_18, %c0_19] : memref<1x4xf32, #tpu.memory_space<vmem>>, vector<1x4xf32>
      tpu.vector_store %arg7[%c0_18, %c0_19], %22 {strides = array<i32>} : memref<1x4xf32, #tpu.memory_space<vmem>>, vector<1x4xf32>,
    } else {
    }
    %c0 = arith.constant 0 : index
    %c0_1 = arith.constant 0 : index
    %c0_2 = arith.constant 0 : index
    %3 = vector.load %arg2[%c0, %c0_1, %c0_2] : memref<1x256x4xbf16, #tpu.memory_space<vmem>>, vector<1x256x4xbf16>
    %4 = vector.shape_cast %3 : vector<1x256x4xbf16> to vector<256x4xbf16>
    %5 = arith.extf %4 : vector<256x4xbf16> to vector<256x4xf32>
    %c0_3 = arith.constant 0 : index
    %c0_4 = arith.constant 0 : index
    %6 = vector.load %arg6[%c0_3, %c0_4] : memref<1x4xf32, #tpu.memory_space<vmem>>, vector<1x4xf32>
    %cst = arith.constant dense<0.000000e+00> : vector<4xf32>
    %7 = vector.multi_reduction <add>, %5, %cst [0] : vector<256x4xf32> to vector<4xf32>
    %8 = vector.shape_cast %7 : vector<4xf32> to vector<1x4xf32>
    %9 = arith.addf %6, %8 : vector<1x4xf32>
    %c0_5 = arith.constant 0 : index
    %c0_6 = arith.constant 0 : index
    %10 = vector.load %arg6[%c0_5, %c0_6] : memref<1x4xf32, #tpu.memory_space<vmem>>, vector<1x4xf32>
    tpu.vector_store %arg6[%c0_5, %c0_6], %9 {strides = array<i32>} : memref<1x4xf32, #tpu.memory_space<vmem>>, vector<1x4xf32>,
    %c0_7 = arith.constant 0 : index
    %c0_8 = arith.constant 0 : index
    %11 = vector.load %arg7[%c0_7, %c0_8] : memref<1x4xf32, #tpu.memory_space<vmem>>, vector<1x4xf32>
    %12 = arith.mulf %5, %5 : vector<256x4xf32>
    %cst_9 = arith.constant dense<0.000000e+00> : vector<4xf32>
    %13 = vector.multi_reduction <add>, %12, %cst_9 [0] : vector<256x4xf32> to vector<4xf32>
    %14 = vector.shape_cast %13 : vector<4xf32> to vector<1x4xf32>
    %15 = arith.addf %11, %14 : vector<1x4xf32>
    %c0_10 = arith.constant 0 : index
    %c0_11 = arith.constant 0 : index
    %16 = vector.load %arg7[%c0_10, %c0_11] : memref<1x4xf32, #tpu.memory_space<vmem>>, vector<1x4xf32>
    tpu.vector_store %arg7[%c0_10, %c0_11], %15 {strides = array<i32>} : memref<1x4xf32, #tpu.memory_space<vmem>>, vector<1x4xf32>,
    %c0_i32_12 = arith.constant 0 : i32
    %17 = arith.cmpi eq, %arg1, %c0_i32_12 : i32
    %18 = arith.extui %17 : i1 to i32
    %c0_i32_13 = arith.constant 0 : i32
    %19 = arith.cmpi ne, %18, %c0_i32_13 : i32
    scf.if %19 {
      %c0_14 = arith.constant 0 : index
      %c0_15 = arith.constant 0 : index
      %20 = vector.load %arg6[%c0_14, %c0_15] : memref<1x4xf32, #tpu.memory_space<vmem>>, vector<1x4xf32>
      %c0_16 = arith.constant 0 : index
      %c0_17 = arith.constant 0 : index
      %21 = vector.load %arg3[%c0_16, %c0_17] : memref<4x4xf32, #tpu.memory_space<vmem>>, vector<4x4xf32>
      %cst_18 = arith.constant dense<0.000000e+00> : vector<1x4xf32>
      %22 = tpu.matmul %20, %21, %cst_18 {dimension_numbers = #tpu.dot_dimension_numbers<[1], [0], [0], [1], [0, 0, 1, 1], [], []>} : vector<1x4xf32>, vector<4x4xf32>, vector<1x4xf32> -> vector<1x4xf32>
      %cst_19 = arith.constant 1.024000e+03 : f32
      %23 = vector.broadcast %cst_19 : f32 to vector<1x4xf32>
      %24 = arith.divf %22, %23 : vector<1x4xf32>
      %c0_20 = arith.constant 0 : index
      %c0_21 = arith.constant 0 : index
      %25 = vector.load %arg7[%c0_20, %c0_21] : memref<1x4xf32, #tpu.memory_space<vmem>>, vector<1x4xf32>
      %c0_22 = arith.constant 0 : index
      %c0_23 = arith.constant 0 : index
      %26 = vector.load %arg3[%c0_22, %c0_23] : memref<4x4xf32, #tpu.memory_space<vmem>>, vector<4x4xf32>
      %cst_24 = arith.constant dense<0.000000e+00> : vector<1x4xf32>
      %27 = tpu.matmul %25, %26, %cst_24 {dimension_numbers = #tpu.dot_dimension_numbers<[1], [0], [0], [1], [0, 0, 1, 1], [], []>} : vector<1x4xf32>, vector<4x4xf32>, vector<1x4xf32> -> vector<1x4xf32>
      %cst_25 = arith.constant 1.024000e+03 : f32
      %28 = vector.broadcast %cst_25 : f32 to vector<1x4xf32>
      %29 = arith.divf %27, %28 : vector<1x4xf32>
      %c0_26 = arith.constant 0 : index
      %c0_27 = arith.constant 0 : index
      %c0_28 = arith.constant 0 : index
      %30 = vector.load %arg4[%c0_26, %c0_27, %c0_28] : memref<1x1x4xf32, #tpu.memory_space<vmem>>, vector<1x1x4xf32>
      %31 = vector.shape_cast %30 : vector<1x1x4xf32> to vector<1x4xf32>
      %32 = vector.shape_cast %24 : vector<1x4xf32> to vector<1x1x4xf32>
      tpu.vector_store %arg4[%c0_26, %c0_27, %c0_28], %32 {strides = array<i32>} : memref<1x1x4xf32, #tpu.memory_space<vmem>>, vector<1x1x4xf32>,
      %33 = arith.mulf %24, %24 : vector<1x4xf32>
      %34 = arith.subf %29, %33 : vector<1x4xf32>
      %cst_29 = arith.constant 9.99999997E-7 : f32
      %35 = vector.broadcast %cst_29 : f32 to vector<1x4xf32>
      %36 = arith.addf %34, %35 : vector<1x4xf32>
      %37 = math.rsqrt %36 : vector<1x4xf32>
      %c0_30 = arith.constant 0 : index
      %c0_31 = arith.constant 0 : index
      %c0_32 = arith.constant 0 : index
      %38 = vector.load %arg5[%c0_30, %c0_31, %c0_32] : memref<1x1x4xf32, #tpu.memory_space<vmem>>, vector<1x1x4xf32>
      %39 = vector.shape_cast %38 : vector<1x1x4xf32> to vector<1x4xf32>
      %40 = vector.shape_cast %37 : vector<1x4xf32> to vector<1x1x4xf32>
      tpu.vector_store %arg5[%c0_30, %c0_31, %c0_32], %40 {strides = array<i32>} : memref<1x1x4xf32, #tpu.memory_space<vmem>>, vector<1x1x4xf32>,
    } else {
    }
    return
  }
  func.func @transform_0(%arg0: i32, %arg1: i32) -> (i32, i32, i32) {
    %c0_i32 = arith.constant 0 : i32
    %c0_i32_0 = arith.constant 0 : i32
    return %arg0, %arg1, %c0_i32 : i32, i32, i32
  }
  func.func @transform_1(%arg0: i32, %arg1: i32) -> (i32, i32) {
    %c0_i32 = arith.constant 0 : i32
    %c0_i32_0 = arith.constant 0 : i32
    %c0_i32_1 = arith.constant 0 : i32
    return %c0_i32, %c0_i32_0 : i32, i32
  }
  func.func @transform_2(%arg0: i32, %arg1: i32) -> (i32, i32, i32) {
    %c0_i32 = arith.constant 0 : i32
    %c0_i32_0 = arith.constant 0 : i32
    %c0_i32_1 = arith.constant 0 : i32
    return %arg0, %c0_i32, %c0_i32_0 : i32, i32, i32
  }
  func.func @transform_3(%arg0: i32, %arg1: i32) -> (i32, i32, i32) {
    %c0_i32 = arith.constant 0 : i32
    %c0_i32_0 = arith.constant 0 : i32
    %c0_i32_1 = arith.constant 0 : i32
    return %arg0, %c0_i32, %c0_i32_0 : i32, i32, i32
  }
}

</mosaic_0001>

<llo_original>
// kernel: tpu_custom_call.1
$region0: #{tpu_custom_call.1}
  #allocation0 [shape = 'u32[]', space=smem, size = 0x4, offset = 0x4, fixed_abs, tag = 'smem constant byte address 0x4 - core index']
  #allocation1 [shape = 'u32[144,128]{1,0:T(1,128)}', space=vmem, size = 0x12000, scoped, tag = 'internal scratch']
  #allocation2 [shape = 'f32[1,4]{1,0:T(1,128)}', space=vmem, size = 0x200, scoped, tag = 'scratch operand']
  #allocation3 [shape = 'f32[1,4]{1,0:T(1,128)}', space=vmem, size = 0x200, scoped, tag = 'scratch operand']
  %s0 = inlined_call_operand.vmem [shape: bf16[2,256,4], index: 0, kind: input, shape index: {}]
  %s1 = inlined_call_operand.vmem [shape: f32[4,4], index: 1, kind: input, shape index: {}]
  %s2 = inlined_call_operand.hbm [shape: f32[2,1,4], index: 2, kind: output, shape index: {0}]
  %s3 = inlined_call_operand.hbm [shape: f32[2,1,4], index: 3, kind: output, shape index: {1}]
  %4 = xla_tuple %s2, %s3
  %s5 = sld [smem:[#allocation0]]
  $region57: #{tpu_custom_call.1} parent=0
    _
  %s7 = ssub.s32 1, %s5
  %s8 = scalar_select 0, %s7, %s5
  $region1: #{tpu_custom_call.1} parent=0
    #allocation4 [shape = 'u8[1024]{0}', space=vmem, size = 0x400, scoped, tag = 'output window, operand 0']
    #allocation5 [shape = 's32[2]{0}', space=sflag, size = 0x8, scoped, tag = 'scoped memory for tpu_custom_call.1']
    #allocation6 [shape = 'u8[1024]{0}', space=vmem, size = 0x400, scoped, tag = 'output window, operand 1']
    #allocation7 [shape = 's32[2]{0}', space=sflag, size = 0x8, scoped, tag = 'scoped memory for tpu_custom_call.1']
    %9 = vsyncpa [#allocation5], 0
    %s10 = scalar_lea.sflag [#allocation5], 1
    %11 = vsyncpa %s10, 0
    %12 = vsyncpa [#allocation7], 0
    %s13 = scalar_lea.sflag [#allocation7], 1
    %14 = vsyncpa %s13, 0
    loop: start=0, step=1, limit=4
    $region2: #{tpu_custom_call.1} parent=1 // loop_pre_header
      _
    $region3: #{tpu_custom_call.1} parent=1 // loop_header
      %s16 = sphi 0, %s20
      %p17 = scmp.ge.s32.totalorder %s16, 4
      %s23 = sphi 0, %s35
      %s24 = sphi 0, %s31
      %s25 = sphi 0, %s23
      %s26 = sphi 0, %s24
      %s27 = sphi 0, %s25
      %s28 = sphi 0, %s26
      %s40 = sphi 0, %s42
      %s43 = sphi 0, %s40
      %s44 = sphi 0, %s43
      %s60 = sphi 0, %s44
      %s64 = sphi 0, %s64
      %s66 = sphi 0, %s64
      %s67 = sphi 0, %s66
      %s81 = sphi 0, %s67
      %s87 = sphi 0, %s89
      %s90 = sphi 0, %s87
      %s91 = sphi 0, %s90
      %s107 = sphi 0, %s91
      %s113 = sphi 0, %s115
      %s116 = sphi 0, %s113
      %s117 = sphi 0, %s116
      %s133 = sphi 0, %s117
    $region4: #{tpu_custom_call.1} parent=1 // loop_header_branch
      %19 = sbr.rel (%p17) target = $region8
    $region5: #{tpu_custom_call.1} parent=1 // loop_body
      %s21 = ssub.s32 %s16, 1
      %s22 = ssub.s32 %s16, 2
      %s29 = sadd.s32 1, %s24
      %p30 = scmp.ge.s32.totalorder %s29, 1
      %s31 = scalar_select %p30, 0, %s29
      %s32 = sadd.s32 1, %s23
      %s33 = scalar_select %p30, %s32, %s23
      %p34 = scmp.ge.s32.totalorder %s33, 2
      %s35 = scalar_select %p34, 0, %s33
      %s36 = ssub.s32 %s23, %s35
      %s37 = ssub.s32 %s24, %s31
      %s38 = sor.u32 %s36, %s37
      %p39 = scmp.eq.s32.totalorder %s38, 0
      %s41 = sadd.s32 %s40, 1
      %s42 = scalar_select %p39, %s40, %s41
      %p45 = pneg %p39
      %p46 = scmp.eq.s32.totalorder %s16, 1
      %p47 = por %p45, %p46
      %p48 = scmp.ne.s32.totalorder %s40, %s43
      %p49 = scmp.eq.s32.totalorder %s16, 0
      %p50 = por %p48, %p49
      %p51 = scmp.ne.s32.totalorder %s40, %s43
      %p52 = scmp.eq.s32.totalorder %s21, 1
      %p53 = por %p51, %p52
      %p54 = scmp.ne.s32.totalorder %s43, %s44
      %p55 = scmp.eq.s32.totalorder %s21, 0
      %p56 = por %p54, %p55
      %p57 = scmp.ne.s32.totalorder %s43, %s44
      %p58 = scmp.eq.s32.totalorder %s22, 1
      %p59 = por %p57, %p58
      %p61 = scmp.ne.s32.totalorder %s44, %s60
      %p62 = scmp.eq.s32.totalorder %s22, 0
      %p63 = por %p61, %p62
      %s65 = sadd.s32 %s64, 1
      %p68 = scmp.eq.s32.totalorder %s16, 1
      %p69 = scmp.ne.s32.totalorder %s64, %s66
      %p70 = scmp.eq.s32.totalorder %s16, 0
      %p71 = por %p69, %p70
      %p72 = scmp.ne.s32.totalorder %s64, %s66
      %p73 = scmp.eq.s32.totalorder %s21, 1
      %p74 = por %p72, %p73
      %p75 = scmp.ne.s32.totalorder %s66, %s67
      %p76 = scmp.eq.s32.totalorder %s21, 0
      %p77 = por %p75, %p76
      %p78 = scmp.ne.s32.totalorder %s66, %s67
      %p79 = scmp.eq.s32.totalorder %s22, 1
      %p80 = por %p78, %p79
      %p82 = scmp.ne.s32.totalorder %s67, %s81
      %p83 = scmp.eq.s32.totalorder %s22, 0
      %p84 = por %p82, %p83
      %s85 = ssub.s32 %s23, %s35
      %p86 = scmp.eq.s32.totalorder %s85, 0
      %s88 = sadd.s32 %s87, 1
      %s89 = scalar_select %p86, %s87, %s88
      %p92 = pneg %p86
      %p93 = scmp.eq.s32.totalorder %s16, 1
      %p94 = por %p92, %p93
      %p95 = scmp.ne.s32.totalorder %s87, %s90
      %p96 = scmp.eq.s32.totalorder %s16, 0
      %p97 = por %p95, %p96
      %p98 = scmp.ne.s32.totalorder %s87, %s90
      %p99 = scmp.eq.s32.totalorder %s21, 1
      %p100 = por %p98, %p99
      %p101 = scmp.ne.s32.totalorder %s90, %s91
      %p102 = scmp.eq.s32.totalorder %s21, 0
      %p103 = por %p101, %p102
      %p104 = scmp.ne.s32.totalorder %s90, %s91
      %p105 = scmp.eq.s32.totalorder %s22, 1
      %p106 = por %p104, %p105
      %p108 = scmp.ne.s32.totalorder %s91, %s107
      %p109 = scmp.eq.s32.totalorder %s22, 0
      %p110 = por %p108, %p109
      %s111 = ssub.s32 %s23, %s35
      %p112 = scmp.eq.s32.totalorder %s111, 0
      %s114 = sadd.s32 %s113, 1
      %s115 = scalar_select %p112, %s113, %s114
      %p118 = pneg %p112
      %p119 = scmp.eq.s32.totalorder %s16, 1
      %p120 = por %p118, %p119
      %p121 = scmp.ne.s32.totalorder %s113, %s116
      %p122 = scmp.eq.s32.totalorder %s16, 0
      %p123 = por %p121, %p122
      %p124 = scmp.ne.s32.totalorder %s113, %s116
      %p125 = scmp.eq.s32.totalorder %s21, 1
      %p126 = por %p124, %p125
      %p127 = scmp.ne.s32.totalorder %s116, %s117
      %p128 = scmp.eq.s32.totalorder %s21, 0
      %p129 = por %p127, %p128
      %p130 = scmp.ne.s32.totalorder %s116, %s117
      %p131 = scmp.eq.s32.totalorder %s22, 1
      %p132 = por %p130, %p131
      %p134 = scmp.ne.s32.totalorder %s117, %s133
      %p135 = scmp.eq.s32.totalorder %s22, 0
      %p136 = por %p134, %p135
      %p137 = scmp.le.s32.totalorder 1, %s16
      %p138 = scmp.lt.s32.totalorder %s16, 3
      %p139 = pnand %p137, %p138
      %p140 = pneg %p139
      // Predicated region
      $region9: #{tpu_custom_call.1} parent=5 // pred_check
        _
      $region10: #{tpu_custom_call.1} parent=5 // pred_check_branch
        %142 = sbr.rel (%p139) target = $region12
      $region11: #{tpu_custom_call.1} parent=5 // pred_region
        %s143 = ssub.s32 %s16, 1
        // Predicated region
        $region13: #{tpu_custom_call.1} parent=11 // pred_check
          %p144 = pneg %p77
        $region14: #{tpu_custom_call.1} parent=11 // pred_check_branch
          %146 = sbr.rel (%p144) target = $region16
        $region15: #{tpu_custom_call.1} parent=11 // pred_region
          _
        $region16: #{tpu_custom_call.1} parent=11 // pred_fallthru
          _
      $region12: #{tpu_custom_call.1} parent=5 // pred_fallthru
        _
      %p147 = scmp.lt.s32.totalorder %s16, 2
      // Predicated region
      $region17: #{tpu_custom_call.1} parent=5 // pred_check
        %p148 = pneg %p147
      $region18: #{tpu_custom_call.1} parent=5 // pred_check_branch
        %150 = sbr.rel (%p148) target = $region20
      $region19: #{tpu_custom_call.1} parent=5 // pred_region
        // Predicated region
        $region21: #{tpu_custom_call.1} parent=19 // pred_check
          %p151 = pneg %p50
        $region22: #{tpu_custom_call.1} parent=19 // pred_check_branch
          %153 = sbr.rel (%p151) target = $region24
        $region23: #{tpu_custom_call.1} parent=19 // pred_region
          %s154 = smul.u32 32, %s24
          %p155 = scmp.lt.s32.totalorder %s23, 1
          %s156 = scalar_select %p155, %s23, 1
          %p157 = scmp.lt.s32.totalorder %s154, 31
          %s158 = scalar_select %p157, %s154, 31
          %s159 = smul.addr %s156, 32
          %s160 = sadd.s32 %s158, %s159
          %s161 = smul.addr %s160, 4
          %s162 = scalar_lea.vmem %s0, %s161
          %s163 = smul.u32 32, %s24
        $region24: #{tpu_custom_call.1} parent=19 // pred_fallthru
          _
      $region20: #{tpu_custom_call.1} parent=5 // pred_fallthru
        _
      %p164 = scmp.le.s32.totalorder 1, %s16
      %p165 = scmp.lt.s32.totalorder %s16, 3
      %p166 = pnand %p164, %p165
      %p167 = pneg %p166
      // Predicated region
      $region25: #{tpu_custom_call.1} parent=5 // pred_check
        _
      $region26: #{tpu_custom_call.1} parent=5 // pred_check_branch
        %169 = sbr.rel (%p166) target = $region28
      $region27: #{tpu_custom_call.1} parent=5 // pred_region
        %s170 = ssub.s32 %s16, 1
        %s171 = smul.u32 32, %s26
        %p172 = scmp.lt.s32.totalorder %s25, 1
        %s173 = scalar_select %p172, %s25, 1
        %p174 = scmp.lt.s32.totalorder %s171, 31
        %s175 = scalar_select %p174, %s171, 31
        %s176 = smul.addr %s173, 32
        %s177 = sadd.s32 %s175, %s176
        %s178 = smul.addr %s177, 4
        %s179 = scalar_lea.vmem %s0, %s178
        %p180 = pneg %p56
        %p181 = pneg %p53
        %p182 = pneg %p77
        %p183 = pneg %p74
        %p184 = pneg %p103
        %p185 = pneg %p100
        %s186 = sand.u32 %s90, 1
        %s187 = scalar_lea.sflag [#allocation5], %s186
        %s188 = sand.u32 %s90, 1
        %s189 = scalar_lea.vmem [#allocation4], %s188
        %p190 = pneg %p129
        %p191 = pneg %p126
        %s192 = sand.u32 %s116, 1
        %s193 = scalar_lea.sflag [#allocation7], %s192
        %s194 = sand.u32 %s116, 1
        %s195 = scalar_lea.vmem [#allocation6], %s194
        %s196 = smul.u32 32, %s26
        %p197 = scmp.lt.s32.totalorder %s25, 1
        %s198 = scalar_select %p197, %s25, 1
        %p199 = scmp.lt.s32.totalorder %s196, 31
        %s200 = scalar_select %p199, %s196, 31
        %s201 = smul.addr %s198, 32
        %s202 = sadd.s32 %s200, %s201
        %s203 = smul.addr %s202, 4
        %s204 = scalar_lea.vmem %s0, %s203
        %s205 = smul.u32 32, %s26
        %p206 = scmp.eq.s32.totalorder %s26, 0
        // Predicated region
        $region29: #{tpu_custom_call.1} parent=27 // pred_check
          %p207 = pneg %p206
        $region30: #{tpu_custom_call.1} parent=27 // pred_check_branch
          %209 = sbr.rel (%p207) target = $region32
        $region31: #{tpu_custom_call.1} parent=27 // pred_region
          %vm210 = vcmask 24576
          %211 = vst.msk [vmem:[#allocation2] sm:$0x1] %vm210, 0.0
          %212 = vst.msk [vmem:[#allocation3] sm:$0x1] %vm210, 0.0
        $region32: #{tpu_custom_call.1} parent=27 // pred_fallthru
          _
        %v213 = vld [vmem:[%s204] sm:$0xf]
        %v214 = vld [vmem:[%s204 + $0x4] sm:$0xf]
        %v215 = vld [vmem:[%s204 + $0x8] sm:$0xf]
        %v216 = vld [vmem:[%s204 + $0xc] sm:$0xf]
        %v217 = vld [vmem:[%s204 + $0x10] sm:$0xf]
        %v218 = vld [vmem:[%s204 + $0x14] sm:$0xf]
        %v219 = vld [vmem:[%s204 + $0x18] sm:$0xf]
        %v220 = vld [vmem:[%s204 + $0x1c] sm:$0xf]
        %v221 = vld [vmem:[%s204 + $0x20] sm:$0xf]
        %v222 = vld [vmem:[%s204 + $0x24] sm:$0xf]
        %v223 = vld [vmem:[%s204 + $0x28] sm:$0xf]
        %v224 = vld [vmem:[%s204 + $0x2c] sm:$0xf]
        %v225 = vld [vmem:[%s204 + $0x30] sm:$0xf]
        %v226 = vld [vmem:[%s204 + $0x34] sm:$0xf]
        %v227 = vld [vmem:[%s204 + $0x38] sm:$0xf]
        %v228 = vld [vmem:[%s204 + $0x3c] sm:$0xf]
        %v229 = vld [vmem:[%s204 + $0x40] sm:$0xf]
        %v230 = vld [vmem:[%s204 + $0x44] sm:$0xf]
        %v231 = vld [vmem:[%s204 + $0x48] sm:$0xf]
        %v232 = vld [vmem:[%s204 + $0x4c] sm:$0xf]
        %v233 = vld [vmem:[%s204 + $0x50] sm:$0xf]
        %v234 = vld [vmem:[%s204 + $0x54] sm:$0xf]
        %v235 = vld [vmem:[%s204 + $0x58] sm:$0xf]
        %v236 = vld [vmem:[%s204 + $0x5c] sm:$0xf]
        %v237 = vld [vmem:[%s204 + $0x60] sm:$0xf]
        %v238 = vld [vmem:[%s204 + $0x64] sm:$0xf]
        %v239 = vld [vmem:[%s204 + $0x68] sm:$0xf]
        %v240 = vld [vmem:[%s204 + $0x6c] sm:$0xf]
        %v241 = vld [vmem:[%s204 + $0x70] sm:$0xf]
        %v242 = vld [vmem:[%s204 + $0x74] sm:$0xf]
        %v243 = vld [vmem:[%s204 + $0x78] sm:$0xf]
        %v244 = vld [vmem:[%s204 + $0x7c] sm:$0xf]
        %v245 = vunpack.c.l.bf16 %v213
        %v246 = vunpack.c.l.bf16 %v214
        %v247 = vunpack.c.l.bf16 %v215
        %v248 = vunpack.c.l.bf16 %v216
        %v249 = vunpack.c.l.bf16 %v217
        %v250 = vunpack.c.l.bf16 %v218
        %v251 = vunpack.c.l.bf16 %v219
        %v252 = vunpack.c.l.bf16 %v220
        %v253 = vunpack.c.l.bf16 %v221
        %v254 = vunpack.c.l.bf16 %v222
        %v255 = vunpack.c.l.bf16 %v223
        %v256 = vunpack.c.l.bf16 %v224
        %v257 = vunpack.c.l.bf16 %v225
        %v258 = vunpack.c.l.bf16 %v226
        %v259 = vunpack.c.l.bf16 %v227
        %v260 = vunpack.c.l.bf16 %v228
        %v261 = vunpack.c.l.bf16 %v229
        %v262 = vunpack.c.l.bf16 %v230
        %v263 = vunpack.c.l.bf16 %v231
        %v264 = vunpack.c.l.bf16 %v232
        %v265 = vunpack.c.l.bf16 %v233
        %v266 = vunpack.c.l.bf16 %v234
        %v267 = vunpack.c.l.bf16 %v235
        %v268 = vunpack.c.l.bf16 %v236
        %v269 = vunpack.c.l.bf16 %v237
        %v270 = vunpack.c.l.bf16 %v238
        %v271 = vunpack.c.l.bf16 %v239
        %v272 = vunpack.c.l.bf16 %v240
        %v273 = vunpack.c.l.bf16 %v241
        %v274 = vunpack.c.l.bf16 %v242
        %v275 = vunpack.c.l.bf16 %v243
        %v276 = vunpack.c.l.bf16 %v244
        %v277 = vld [vmem:[#allocation2] sm:$0x1]
        %vm278 = vcmask 31744
        %v279 = vsel %vm278, %v245, 0.0
        %v280 = vsel %vm278, %v246, 0.0
        %v281 = vadd.f32 %v279, %v280
        %v282 = vsel %vm278, %v247, 0.0
        %v283 = vadd.f32 %v281, %v282
        %v284 = vsel %vm278, %v248, 0.0
        %v285 = vadd.f32 %v283, %v284
        %v286 = vsel %vm278, %v249, 0.0
        %v287 = vadd.f32 %v285, %v286
        %v288 = vsel %vm278, %v250, 0.0
        %v289 = vadd.f32 %v287, %v288
        %v290 = vsel %vm278, %v251, 0.0
        %v291 = vadd.f32 %v289, %v290
        %v292 = vsel %vm278, %v252, 0.0
        %v293 = vadd.f32 %v291, %v292
        %v294 = vsel %vm278, %v253, 0.0
        %v295 = vadd.f32 %v293, %v294
        %v296 = vsel %vm278, %v254, 0.0
        %v297 = vadd.f32 %v295, %v296
        %v298 = vsel %vm278, %v255, 0.0
        %v299 = vadd.f32 %v297, %v298
        %v300 = vsel %vm278, %v256, 0.0
        %v301 = vadd.f32 %v299, %v300
        %v302 = vsel %vm278, %v257, 0.0
        %v303 = vadd.f32 %v301, %v302
        %v304 = vsel %vm278, %v258, 0.0
        %v305 = vadd.f32 %v303, %v304
        %v306 = vsel %vm278, %v259, 0.0
        %v307 = vadd.f32 %v305, %v306
        %v308 = vsel %vm278, %v260, 0.0
        %v309 = vadd.f32 %v307, %v308
        %v310 = vsel %vm278, %v261, 0.0
        %v311 = vadd.f32 %v309, %v310
        %v312 = vsel %vm278, %v262, 0.0
        %v313 = vadd.f32 %v311, %v312
        %v314 = vsel %vm278, %v263, 0.0
        %v315 = vadd.f32 %v313, %v314
        %v316 = vsel %vm278, %v264, 0.0
        %v317 = vadd.f32 %v315, %v316
        %v318 = vsel %vm278, %v265, 0.0
        %v319 = vadd.f32 %v317, %v318
        %v320 = vsel %vm278, %v266, 0.0
        %v321 = vadd.f32 %v319, %v320
        %v322 = vsel %vm278, %v267, 0.0
        %v323 = vadd.f32 %v321, %v322
        %v324 = vsel %vm278, %v268, 0.0
        %v325 = vadd.f32 %v323, %v324
        %v326 = vsel %vm278, %v269, 0.0
        %v327 = vadd.f32 %v325, %v326
        %v328 = vsel %vm278, %v270, 0.0
        %v329 = vadd.f32 %v327, %v328
        %v330 = vsel %vm278, %v271, 0.0
        %v331 = vadd.f32 %v329, %v330
        %v332 = vsel %vm278, %v272, 0.0
        %v333 = vadd.f32 %v331, %v332
        %v334 = vsel %vm278, %v273, 0.0
        %v335 = vadd.f32 %v333, %v334
        %v336 = vsel %vm278, %v274, 0.0
        %v337 = vadd.f32 %v335, %v336
        %v338 = vsel %vm278, %v275, 0.0
        %v339 = vadd.f32 %v337, %v338
        %v340 = vsel %vm278, %v276, 0.0
        %v341 = vadd.f32 %v339, %v340
        %v342 = vrot.slane %v341, 4
        %v343 = vadd.f32 %v341, %v342
        %v344 = vrot.slane %v343, 2
        %v345 = vadd.f32 %v343, %v344
        %v346 = vrot.slane %v345, 1
        %v347 = vadd.f32 %v345, %v346
        %v348 = vadd.f32 %v277, %v347
        %vm349 = vcmask 24576
        %350 = vst.msk [vmem:[#allocation2] sm:$0x1] %vm349, %v348
        %v351 = vld [vmem:[#allocation3] sm:$0x1]
        %v352 = vmul.f32 %v245, %v245
        %v353 = vmul.f32 %v246, %v246
        %v354 = vmul.f32 %v247, %v247
        %v355 = vmul.f32 %v248, %v248
        %v356 = vmul.f32 %v249, %v249
        %v357 = vmul.f32 %v250, %v250
        %v358 = vmul.f32 %v251, %v251
        %v359 = vmul.f32 %v252, %v252
        %v360 = vmul.f32 %v253, %v253
        %v361 = vmul.f32 %v254, %v254
        %v362 = vmul.f32 %v255, %v255
        %v363 = vmul.f32 %v256, %v256
        %v364 = vmul.f32 %v257, %v257
        %v365 = vmul.f32 %v258, %v258
        %v366 = vmul.f32 %v259, %v259
        %v367 = vmul.f32 %v260, %v260
        %v368 = vmul.f32 %v261, %v261
        %v369 = vmul.f32 %v262, %v262
        %v370 = vmul.f32 %v263, %v263
        %v371 = vmul.f32 %v264, %v264
        %v372 = vmul.f32 %v265, %v265
        %v373 = vmul.f32 %v266, %v266
        %v374 = vmul.f32 %v267, %v267
        %v375 = vmul.f32 %v268, %v268
        %v376 = vmul.f32 %v269, %v269
        %v377 = vmul.f32 %v270, %v270
        %v378 = vmul.f32 %v271, %v271
        %v379 = vmul.f32 %v272, %v272
        %v380 = vmul.f32 %v273, %v273
        %v381 = vmul.f32 %v274, %v274
        %v382 = vmul.f32 %v275, %v275
        %v383 = vmul.f32 %v276, %v276
        %v384 = vsel %vm278, %v352, 0.0
        %v385 = vsel %vm278, %v353, 0.0
        %v386 = vadd.f32 %v384, %v385
        %v387 = vsel %vm278, %v354, 0.0
        %v388 = vadd.f32 %v386, %v387
        %v389 = vsel %vm278, %v355, 0.0
        %v390 = vadd.f32 %v388, %v389
        %v391 = vsel %vm278, %v356, 0.0
        %v392 = vadd.f32 %v390, %v391
        %v393 = vsel %vm278, %v357, 0.0
        %v394 = vadd.f32 %v392, %v393
        %v395 = vsel %vm278, %v358, 0.0
        %v396 = vadd.f32 %v394, %v395
        %v397 = vsel %vm278, %v359, 0.0
        %v398 = vadd.f32 %v396, %v397
        %v399 = vsel %vm278, %v360, 0.0
        %v400 = vadd.f32 %v398, %v399
        %v401 = vsel %vm278, %v361, 0.0
        %v402 = vadd.f32 %v400, %v401
        %v403 = vsel %vm278, %v362, 0.0
        %v404 = vadd.f32 %v402, %v403
        %v405 = vsel %vm278, %v363, 0.0
        %v406 = vadd.f32 %v404, %v405
        %v407 = vsel %vm278, %v364, 0.0
        %v408 = vadd.f32 %v406, %v407
        %v409 = vsel %vm278, %v365, 0.0
        %v410 = vadd.f32 %v408, %v409
        %v411 = vsel %vm278, %v366, 0.0
        %v412 = vadd.f32 %v410, %v411
        %v413 = vsel %vm278, %v367, 0.0
        %v414 = vadd.f32 %v412, %v413
        %v415 = vsel %vm278, %v368, 0.0
        %v416 = vadd.f32 %v414, %v415
        %v417 = vsel %vm278, %v369, 0.0
        %v418 = vadd.f32 %v416, %v417
        %v419 = vsel %vm278, %v370, 0.0
        %v420 = vadd.f32 %v418, %v419
        %v421 = vsel %vm278, %v371, 0.0
        %v422 = vadd.f32 %v420, %v421
        %v423 = vsel %vm278, %v372, 0.0
        %v424 = vadd.f32 %v422, %v423
        %v425 = vsel %vm278, %v373, 0.0
        %v426 = vadd.f32 %v424, %v425
        %v427 = vsel %vm278, %v374, 0.0
        %v428 = vadd.f32 %v426, %v427
        %v429 = vsel %vm278, %v375, 0.0
        %v430 = vadd.f32 %v428, %v429
        %v431 = vsel %vm278, %v376, 0.0
        %v432 = vadd.f32 %v430, %v431
        %v433 = vsel %vm278, %v377, 0.0
        %v434 = vadd.f32 %v432, %v433
        %v435 = vsel %vm278, %v378, 0.0
        %v436 = vadd.f32 %v434, %v435
        %v437 = vsel %vm278, %v379, 0.0
        %v438 = vadd.f32 %v436, %v437
        %v439 = vsel %vm278, %v380, 0.0
        %v440 = vadd.f32 %v438, %v439
        %v441 = vsel %vm278, %v381, 0.0
        %v442 = vadd.f32 %v440, %v441
        %v443 = vsel %vm278, %v382, 0.0
        %v444 = vadd.f32 %v442, %v443
        %v445 = vsel %vm278, %v383, 0.0
        %v446 = vadd.f32 %v444, %v445
        %v447 = vrot.slane %v446, 4
        %v448 = vadd.f32 %v446, %v447
        %v449 = vrot.slane %v448, 2
        %v450 = vadd.f32 %v448, %v449
        %v451 = vrot.slane %v450, 1
        %v452 = vadd.f32 %v450, %v451
        %v453 = vadd.f32 %v351, %v452
        %454 = vst.msk [vmem:[#allocation3] sm:$0x1] %vm349, %v453
        // Predicated region
        $region33: #{tpu_custom_call.1} parent=27 // pred_check
          %p455 = pneg %p206
        $region34: #{tpu_custom_call.1} parent=27 // pred_check_branch
          %457 = sbr.rel (%p455) target = $region36
        $region35: #{tpu_custom_call.1} parent=27 // pred_region
          %v458 = vld [vmem:[#allocation2] sm:$0x1]
          %v459 = vld [vmem:[%s1] sm:$0xf]
          %v461 = vsel %vm278, %v458, 0
          %vm463 = vcmask 1043456
          %v465 = vsel %vm463, %v459, 0
          %467 = vmatprep.subr.mxu0 0.0
          %468 = vmatpush1.msra.mxu0 0.0
          %469 = vmatprep.subr.mxu0 0.0
          %470 = vmatpush1.msra.mxu0 0.0
          %471 = vmatprep.subr.mxu0 0.0
          %472 = vmatpush1.msra.mxu0 0.0
          %473 = vmatprep.subr.mxu0 0.0
          %474 = vmatpush1.msra.mxu0 0.0
          %475 = vmatprep.subr.mxu0 0.0
          %476 = vmatpush1.msra.mxu0 0.0
          %477 = vmatprep.subr.mxu0 0.0
          %478 = vmatpush1.msra.mxu0 0.0
          %479 = vmatprep.subr.mxu0 0.0
          %480 = vmatpush1.msra.mxu0 0.0
          %481 = vmatprep.subr.mxu0 0.0
          %482 = vmatpush1.msra.mxu0 0.0
          %483 = vmatprep.subr.mxu0 0.0
          %484 = vmatpush1.msra.mxu0 0.0
          %485 = vmatprep.subr.mxu0 0.0
          %486 = vmatpush1.msra.mxu0 0.0
          %487 = vmatprep.subr.mxu0 0.0
          %488 = vmatpush1.msra.mxu0 0.0
          %489 = vmatprep.subr.mxu0 0.0
          %490 = vmatpush1.msra.mxu0 0.0
          %491 = vmatprep.subr.mxu0 0.0
          %492 = vmatpush1.msra.mxu0 0.0
          %493 = vmatprep.subr.mxu0 0.0
          %494 = vmatpush1.msra.mxu0 0.0
          %495 = vmatprep.subr.mxu0 0.0
          %496 = vmatpush1.msra.mxu0 0.0
          %497 = vmatprep.subr.mxu0 0.0
          %498 = vmatpush1.msra.mxu0 %v465
          %499 = vmatprep.subr.mxu0 0.0
          %500 = vmatpush2.msra.mxu0 0.0
          %501 = vmatprep.subr.mxu0 0.0
          %502 = vmatpush2.msra.mxu0 0.0
          %503 = vmatprep.subr.mxu0 0.0
          %504 = vmatpush2.msra.mxu0 0.0
          %505 = vmatprep.subr.mxu0 0.0
          %506 = vmatpush2.msra.mxu0 0.0
          %507 = vmatprep.subr.mxu0 0.0
          %508 = vmatpush2.msra.mxu0 0.0
          %509 = vmatprep.subr.mxu0 0.0
          %510 = vmatpush2.msra.mxu0 0.0
          %511 = vmatprep.subr.mxu0 0.0
          %512 = vmatpush2.msra.mxu0 0.0
          %513 = vmatprep.subr.mxu0 0.0
          %514 = vmatpush2.msra.mxu0 0.0
          %515 = vmatprep.subr.mxu0 0.0
          %516 = vmatpush2.msra.mxu0 0.0
          %517 = vmatprep.subr.mxu0 0.0
          %518 = vmatpush2.msra.mxu0 0.0
          %519 = vmatprep.subr.mxu0 0.0
          %520 = vmatpush2.msra.mxu0 0.0
          %521 = vmatprep.subr.mxu0 0.0
          %522 = vmatpush2.msra.mxu0 0.0
          %523 = vmatprep.subr.mxu0 0.0
          %524 = vmatpush2.msra.mxu0 0.0
          %525 = vmatprep.subr.mxu0 0.0
          %526 = vmatpush2.msra.mxu0 0.0
          %527 = vmatprep.subr.mxu0 0.0
          %528 = vmatpush2.msra.mxu0 0.0
          %529 = vmatprep.subr.mxu0 0.0
          %530 = vmatpush2.msra.mxu0 0.0
          %531 = vmatprep.mubr.f32.mxu0 0.0
          %532 = vmatmul.mubr.f32.gmra.mxu0 %v461
          %v533 = vpop.f32.mrf.mxu0
          %v534 = vadd.f32 0.0, %v533
          %v535 = vpop.f32.mrf.mxu0
          %536 = vdwg.mxu0
          %v537 = vrcp.pop 1024.0
          %v538 = vmul.f32 %v534, %v537
          %v539 = vld [vmem:[#allocation3] sm:$0x1]
          %v541 = vsel %vm278, %v539, 0
          %543 = vmatprep.subr.mxu0 0.0
          %544 = vmatpush1.msra.mxu0 0.0
          %545 = vmatprep.subr.mxu0 0.0
          %546 = vmatpush1.msra.mxu0 0.0
          %547 = vmatprep.subr.mxu0 0.0
          %548 = vmatpush1.msra.mxu0 0.0
          %549 = vmatprep.subr.mxu0 0.0
          %550 = vmatpush1.msra.mxu0 0.0
          %551 = vmatprep.subr.mxu0 0.0
          %552 = vmatpush1.msra.mxu0 0.0
          %553 = vmatprep.subr.mxu0 0.0
          %554 = vmatpush1.msra.mxu0 0.0
          %555 = vmatprep.subr.mxu0 0.0
          %556 = vmatpush1.msra.mxu0 0.0
          %557 = vmatprep.subr.mxu0 0.0
          %558 = vmatpush1.msra.mxu0 0.0
          %559 = vmatprep.subr.mxu0 0.0
          %560 = vmatpush1.msra.mxu0 0.0
          %561 = vmatprep.subr.mxu0 0.0
          %562 = vmatpush1.msra.mxu0 0.0
          %563 = vmatprep.subr.mxu0 0.0
          %564 = vmatpush1.msra.mxu0 0.0
          %565 = vmatprep.subr.mxu0 0.0
          %566 = vmatpush1.msra.mxu0 0.0
          %567 = vmatprep.subr.mxu0 0.0
          %568 = vmatpush1.msra.mxu0 0.0
          %569 = vmatprep.subr.mxu0 0.0
          %570 = vmatpush1.msra.mxu0 0.0
          %571 = vmatprep.subr.mxu0 0.0
          %572 = vmatpush1.msra.mxu0 0.0
          %573 = vmatprep.subr.mxu0 0.0
          %574 = vmatpush1.msra.mxu0 %v465
          %575 = vmatprep.subr.mxu0 0.0
          %576 = vmatpush2.msra.mxu0 0.0
          %577 = vmatprep.subr.mxu0 0.0
          %578 = vmatpush2.msra.mxu0 0.0
          %579 = vmatprep.subr.mxu0 0.0
          %580 = vmatpush2.msra.mxu0 0.0
          %581 = vmatprep.subr.mxu0 0.0
          %582 = vmatpush2.msra.mxu0 0.0
          %583 = vmatprep.subr.mxu0 0.0
          %584 = vmatpush2.msra.mxu0 0.0
          %585 = vmatprep.subr.mxu0 0.0
          %586 = vmatpush2.msra.mxu0 0.0
          %587 = vmatprep.subr.mxu0 0.0
          %588 = vmatpush2.msra.mxu0 0.0
          %589 = vmatprep.subr.mxu0 0.0
          %590 = vmatpush2.msra.mxu0 0.0
          %591 = vmatprep.subr.mxu0 0.0
          %592 = vmatpush2.msra.mxu0 0.0
          %593 = vmatprep.subr.mxu0 0.0
          %594 = vmatpush2.msra.mxu0 0.0
          %595 = vmatprep.subr.mxu0 0.0
          %596 = vmatpush2.msra.mxu0 0.0
          %597 = vmatprep.subr.mxu0 0.0
          %598 = vmatpush2.msra.mxu0 0.0
          %599 = vmatprep.subr.mxu0 0.0
          %600 = vmatpush2.msra.mxu0 0.0
          %601 = vmatprep.subr.mxu0 0.0
          %602 = vmatpush2.msra.mxu0 0.0
          %603 = vmatprep.subr.mxu0 0.0
          %604 = vmatpush2.msra.mxu0 0.0
          %605 = vmatprep.subr.mxu0 0.0
          %606 = vmatpush2.msra.mxu0 0.0
          %607 = vmatprep.mubr.f32.mxu0 0.0
          %608 = vmatmul.mubr.f32.gmra.mxu0 %v541
          %v609 = vpop.f32.mrf.mxu0
          %v610 = vadd.f32 0.0, %v609
          %v611 = vpop.f32.mrf.mxu0
          %612 = vdwg.mxu0
          %v613 = vmul.f32 %v610, %v537
          %614 = vst.msk [vmem:[%s189] sm:$0x1] %vm349, %v538
          %v615 = vmul.f32 %v538, %v538
          %v616 = vsub.f32 %v613, %v615
          %v617 = vadd.f32 %v616, 1e-06
          %v618 = vrsqrt.pop %v617
          %619 = vst.msk [vmem:[%s195] sm:$0x1] %vm349, %v618
        $region36: #{tpu_custom_call.1} parent=27 // pred_fallthru
          _
        %s620 = sand.u32 %s90, 1
        %s621 = scalar_lea.sflag [#allocation5], %s620
        %s622 = sand.u32 %s90, 1
        %s623 = scalar_lea.vmem [#allocation4], %s622
        %s624 = sand.u32 %s116, 1
        %s625 = scalar_lea.sflag [#allocation7], %s624
        %s626 = sand.u32 %s116, 1
        %s627 = scalar_lea.vmem [#allocation6], %s626
        // Predicated region
        $region37: #{tpu_custom_call.1} parent=27 // pred_check
          %p628 = pneg %p100
        $region38: #{tpu_custom_call.1} parent=27 // pred_check_branch
          %630 = sbr.rel (%p628) target = $region40
        $region39: #{tpu_custom_call.1} parent=27 // pred_region
          %s632 = ssub.s32 16, 16
          %633 = vsyncadd %s621, %s632
          %s634 = smul.addr %s25, 16
          %s635 = scalar_lea.hbm %s2, %s634
          %s637 = sshll.u32 %s623, 4
          %s638 = int_to_ptr.vmem [resolvable:$true] %s637
          %640 = dma.vmem_to_hbm [thread:$0]  %s638, 16, %s635, %s621
        $region40: #{tpu_custom_call.1} parent=27 // pred_fallthru
          _
        // Predicated region
        $region41: #{tpu_custom_call.1} parent=27 // pred_check
          %p641 = pneg %p126
        $region42: #{tpu_custom_call.1} parent=27 // pred_check_branch
          %643 = sbr.rel (%p641) target = $region44
        $region43: #{tpu_custom_call.1} parent=27 // pred_region
          %s645 = ssub.s32 16, 16
          %646 = vsyncadd %s625, %s645
          %s647 = smul.addr %s25, 16
          %s648 = scalar_lea.hbm %s3, %s647
          %s650 = sshll.u32 %s627, 4
          %s651 = int_to_ptr.vmem [resolvable:$true] %s650
          %653 = dma.vmem_to_hbm [thread:$0]  %s651, 16, %s648, %s625
        $region44: #{tpu_custom_call.1} parent=27 // pred_fallthru
          _
      $region28: #{tpu_custom_call.1} parent=5 // pred_fallthru
        _
      %p654 = scmp.le.s32.totalorder 2, %s16
      // Predicated region
      $region45: #{tpu_custom_call.1} parent=5 // pred_check
        %p655 = pneg %p654
      $region46: #{tpu_custom_call.1} parent=5 // pred_check_branch
        %657 = sbr.rel (%p655) target = $region48
      $region47: #{tpu_custom_call.1} parent=5 // pred_region
        %s658 = ssub.s32 %s16, 2
        // Predicated region
        $region49: #{tpu_custom_call.1} parent=47 // pred_check
          %p659 = pneg %p106
        $region50: #{tpu_custom_call.1} parent=47 // pred_check_branch
          %661 = sbr.rel (%p659) target = $region52
        $region51: #{tpu_custom_call.1} parent=47 // pred_region
          %s662 = sand.u32 %s91, 1
          %s663 = scalar_lea.sflag [#allocation5], %s662
          %s664 = sand.u32 %s91, 1
          %s665 = scalar_lea.vmem [#allocation4], %s664
          %666 = dma.done %s663, 16
        $region52: #{tpu_custom_call.1} parent=47 // pred_fallthru
          _
        // Predicated region
        $region53: #{tpu_custom_call.1} parent=47 // pred_check
          %p667 = pneg %p132
        $region54: #{tpu_custom_call.1} parent=47 // pred_check_branch
          %669 = sbr.rel (%p667) target = $region56
        $region55: #{tpu_custom_call.1} parent=47 // pred_region
          %s670 = sand.u32 %s117, 1
          %s671 = scalar_lea.sflag [#allocation7], %s670
          %s672 = sand.u32 %s117, 1
          %s673 = scalar_lea.vmem [#allocation6], %s672
          %674 = dma.done %s671, 16
        $region56: #{tpu_custom_call.1} parent=47 // pred_fallthru
          _
      $region48: #{tpu_custom_call.1} parent=5 // pred_fallthru
        _
    $region6: #{tpu_custom_call.1} parent=1 // loop_footer
      %s20 = sadd.s32 1, %s16
    $region7: #{tpu_custom_call.1} parent=1 // loop_footer_branch
      %15 = sbr.rel target = $region3
    $region8: #{tpu_custom_call.1} parent=1 // loop_exit
      _
    %675 = vsyncpa [#allocation5], 1
    %s676 = scalar_lea.sflag [#allocation5], 1
    %677 = vsyncpa %s676, 1
    %678 = vsyncpa [#allocation7], 1
    %s679 = scalar_lea.sflag [#allocation7], 1
    %680 = vsyncpa %s679, 1

</llo_original>
